<compile_context>
chip_gen: v7x
topology: tpu7x:2x2x1
jax: 0.10.0
libtpu: 0.0.40
codegen_flags: <defaults>
</compile_context>

<pallas_src>
import numpy as np
import jax
import jax.numpy as jnp
from jax.experimental import pallas as pl
from jax.experimental.pallas import tpu as pltpu


# ----------------------------------------------------------------------------
# Pallas kernel: lane-dense broadcast add
# ----------------------------------------------------------------------------
def _add_pos_kernel(x_ref, pos_ref, o_ref):
    # x: [tile_b, tile_len], pos: [1, tile_len] (broadcast over batch rows).
    o_ref[...] = (x_ref[...] + pos_ref[...]).astype(o_ref.dtype)


# Tile-size policy (per review): ~0.5-2 MiB per x block, never above a hard
# cap; double-buffered x + out + pos stays far below v5e's 16 MiB scoped
# default and v7x's 64 MiB physical VMEM.
_X_BLOCK_BUDGET_BYTES = 1 << 20      # target bytes per x block (~1 MiB)
_X_BLOCK_HARD_CAP_BYTES = 4 << 20    # reject tilings above this (XLA fallback)
_VMEM_LIMIT_BYTES = 32 << 20         # explicit scoped-VMEM limit (safe on all gens)
_MIN_PALLAS_BYTES = 4 << 20          # below this, plain XLA beats a pallas_call


def _pick_tiles(B, L, itemsize):
    """Return (tile_b, tile_len) or None if no VMEM-safe tiling exists."""
    # --- batch (sublane) tile: native packed height for the dtype ---------
    native = max(8, 32 // itemsize)            # 8 f32, 16 bf16, 32 int8/fp8
    tile_b = None
    for t in range(native, 7, -8):             # native, native-8, ..., 8
        if B % t == 0:
            tile_b = t
            break
    if tile_b is None:
        tile_b = B                             # full-B block (B not /8-divisible)

    # --- lane tile: biggest multiple of 128 dividing L within the budget --
    if L % 128 == 0:
        cap = max(128, (_X_BLOCK_BUDGET_BYTES // (tile_b * itemsize)) // 128 * 128)
        tile_len, t = 128, 128
        limit = min(L, cap)
        while t <= limit:
            if L % t == 0:
                tile_len = t
            t += 128
    else:
        tile_len = L                           # must take the full row

    # Hard VMEM safety: never emit a block that can blow the scoped limit.
    if tile_b * tile_len * itemsize > _X_BLOCK_HARD_CAP_BYTES:
        return None

    # v7x megacore: guarantee >= 2 grid steps along a parallel axis when we can.
    if (B // tile_b) * (L // tile_len) < 2:
        if tile_len % 256 == 0:
            tile_len //= 2
        elif tile_b % 16 == 0:
            tile_b //= 2
    return tile_b, tile_len


def pallas_add_pos(x_flat, pos_flat, tile_b, tile_len):
    """x_flat: [B, L], pos_flat: [1, L] (same dtype) -> x_flat + pos_flat."""
    B, L = x_flat.shape
    # L-chunks outermost, batch innermost: pos's block index is constant over
    # the inner batch loop, so Pallas loads each pos chunk exactly once.
    grid = (L // tile_len, B // tile_b)
    # NOTE: input_output_aliases={0: 0} (donate x) is a valid further saving
    # when the caller gives up x; left off here to keep x usable by callers.
    return pl.pallas_call(
        _add_pos_kernel,
        out_shape=jax.ShapeDtypeStruct((B, L), x_flat.dtype),
        grid=grid,
        in_specs=[
            pl.BlockSpec((tile_b, tile_len), lambda c, b: (b, c)),
            pl.BlockSpec((1, tile_len), lambda c, b: (0, c)),
        ],
        out_specs=pl.BlockSpec((tile_b, tile_len), lambda c, b: (b, c)),
        compiler_params=pltpu.CompilerParams(
            dimension_semantics=("parallel", "parallel"),
            vmem_limit_bytes=_VMEM_LIMIT_BYTES,
        ),
    )(x_flat, pos_flat)


# ----------------------------------------------------------------------------
# Module (init in numpy / plain JAX, forward hot path in Pallas)
# ----------------------------------------------------------------------------
class LaplacianPositionalEncoding:
    def __init__(self, patch_size, img_size, dim, normalized=True, key=None):
        self.patch_size = patch_size
        self.img_size = img_size
        self.dim = dim
        self.normalized = normalized
        self.grid_h = img_size // patch_size
        self.grid_w = img_size // patch_size
        self.num_patches = self.grid_h * self.grid_w

        # --- grid-graph adjacency / Laplacian (init-time, numpy) ---
        adj = np.zeros((self.num_patches, self.num_patches), dtype=np.float64)
        for i in range(self.grid_h):
            for j in range(self.grid_w):
                node = i * self.grid_w + j
                nbrs = []
                if i > 0:
                    nbrs.append((i - 1) * self.grid_w + j)
                if j > 0:
                    nbrs.append(i * self.grid_w + (j - 1))
                if i < self.grid_h - 1:
                    nbrs.append((i + 1) * self.grid_w + j)
                if j < self.grid_w - 1:
                    nbrs.append(i * self.grid_w + (j + 1))
                for nb in nbrs:
                    adj[node, nb] = 1.0
                    adj[nb, node] = 1.0
        degree = np.diag(adj.sum(axis=1))
        laplacian = degree - adj

        eigvals, eigvecs = np.linalg.eigh(laplacian)
        k = min(self.num_patches, self.dim)
        basis = eigvecs[:, :k]
        if self.normalized:
            weights = 1.0 / np.sqrt(eigvals[:k] + 1e-06)
            weights[0] = 0.0
            basis = basis * weights[None, :]
        basis = jnp.asarray(basis.astype(np.float32))

        # --- deterministic Linear(k, dim) parameters (PyTorch-style init) ---
        if key is None:
            key = jax.random.PRNGKey(0)
        kw, kb = jax.random.split(key)
        bound = 1.0 / float(np.sqrt(k))
        w = jax.random.uniform(kw, (k, dim), jnp.float32, -bound, bound)  # W^T
        b = jax.random.uniform(kb, (dim,), jnp.float32, -bound, bound)

        # One-shot init-time projection: plain XLA matmul (tiny vs. the MXU).
        self.pos_emb = jnp.dot(basis, w) + b  # [N, dim], float32

        # Cache of sliced/padded + dtype-cast + flattened pos variants.
        self._pos_cache = {}

    # ------------------------------------------------------------------
    def _pos_flat_for(self, C, dtype):
        key = (int(C), str(dtype))
        cached = self._pos_cache.get(key)
        if cached is not None:
            return cached
        pos = self.pos_emb
        if C != self.dim:
            if C < self.dim:
                pos = pos[:, :C]
            else:
                # Matches the PyTorch reference: F.pad with zeros on channels.
                pos = jnp.pad(pos, ((0, 0), (0, C - self.dim)))
        pos_flat = pos.astype(dtype).reshape(1, self.num_patches * C)
        self._pos_cache[key] = pos_flat
        return pos_flat

    # ------------------------------------------------------------------
    def __call__(self, x, force_pallas=False):
        if x.ndim == 4:
            B, C, H, W = x.shape
            assert H == self.grid_h and W == self.grid_w, (
                f"Input size {H}x{W} doesn't match expected "
                f"{self.grid_h}x{self.grid_w}"
            )
            # Let XLA fuse NCHW->BNC transpose + broadcast add into ONE pass;
            # a separate Pallas add here would add an extra HBM round-trip.
            # TODO(synk): fuse the transpose into the Pallas kernel itself
            # (read (C, tile_n) blocks, add pos^T, write [B, N, C]).
            x_bnc = jnp.transpose(x.reshape(B, C, H * W), (0, 2, 1))
            pos = self._pos_flat_for(C, x.dtype).reshape(self.num_patches, C)
            return x_bnc + pos[None, :, :]

        B, N, C = x.shape
        assert N == self.num_patches, (
            f"Expected {self.num_patches} patches, got {N}"
        )
        pos_flat = self._pos_flat_for(C, x.dtype)        # [1, N*C], x's dtype
        L = N * C
        itemsize = np.dtype(x.dtype).itemsize

        use_pallas = force_pallas or (B * L * itemsize >= _MIN_PALLAS_BYTES)
        tiles = _pick_tiles(B, L, itemsize) if use_pallas else None
        if tiles is None:
            # Tiny problem or no VMEM-safe tiling: plain XLA broadcast add
            # (fuses into neighbours, beats a pallas_call at these sizes).
            return x + pos_flat.reshape(N, C)[None, :, :]

        x_flat = x.reshape(B, L)                         # free: contiguous
        out_flat = pallas_add_pos(x_flat, pos_flat, *tiles)
        return out_flat.reshape(B, N, C)


# ----------------------------------------------------------------------------
if __name__ == "__main__":
    patch_size = 4
    img_size = 32          # grid 8x8 -> num_patches = 64
    dim = 32

    module = LaplacianPositionalEncoding(
        patch_size, img_size, dim, normalized=True, key=jax.random.PRNGKey(42)
    )

    key = jax.random.PRNGKey(0)
    k1, k2, k3 = jax.random.split(key, 3)

    # --- 4-D NCHW float32 path: [B, C, H, W] (XLA-fused transpose + add) ---
    B = 2
    x4 = jax.random.normal(
        k1, (B, dim, module.grid_h, module.grid_w), dtype=jnp.float32
    )
    out4 = jax.block_until_ready(module(x4))
    x4_bnc = jnp.transpose(x4.reshape(B, dim, module.num_patches), (0, 2, 1))
    ref4 = x4_bnc + module.pos_emb[None, :, :]
    assert out4.shape == (B, module.num_patches, dim)
    np.testing.assert_allclose(
        np.asarray(out4), np.asarray(ref4), rtol=1e-5, atol=1e-5
    )

    # --- 3-D [B, N, C] bfloat16 path, forced through the Pallas kernel ---
    B2 = 16
    x3 = jax.random.normal(
        k2, (B2, module.num_patches, dim), dtype=jnp.float32
    ).astype(jnp.bfloat16)
    out3 = jax.block_until_ready(module(x3, force_pallas=True))
    ref3 = x3 + module.pos_emb.astype(jnp.bfloat16)[None, :, :]
    assert out3.shape == (B2, module.num_patches, dim)
    assert out3.dtype == jnp.bfloat16
    np.testing.assert_allclose(
        np.asarray(out3).astype(np.float32),
        np.asarray(ref3).astype(np.float32),
        rtol=2e-2, atol=2e-2,
    )

    # --- 3-D [B, N, C] float32 with C < dim (pos sliced), Pallas path ---
    B3, C3 = 8, 16
    x5 = jax.random.normal(k3, (B3, module.num_patches, C3), dtype=jnp.float32)
    out5 = jax.block_until_ready(module(x5, force_pallas=True))
    ref5 = x5 + module.pos_emb[None, :, :C3]
    assert out5.shape == (B3, module.num_patches, C3)
    np.testing.assert_allclose(
        np.asarray(out5), np.asarray(ref5), rtol=1e-5, atol=1e-5
    )

    print("KERNEL_OK")
</pallas_src>

<mosaic_0001>
module attributes {stable_mosaic.version = 11 : i64} {
  func.func @_add_pos_kernel(%arg0: i32, %arg1: i32, %arg2: memref<16x1024xbf16, #tpu.memory_space<vmem>>, %arg3: memref<1x1024xbf16, #tpu.memory_space<vmem>>, %arg4: memref<16x1024xbf16, #tpu.memory_space<vmem>>) attributes {dimension_semantics = [#tpu.dimension_semantics<parallel>, #tpu.dimension_semantics<parallel>], iteration_bounds = array<i64: 2, 1>, scalar_prefetch = 0 : i64, scratch_operands = 0 : i64, tpu.core_type = #tpu.core_type<tc>, window_params = [{transform_indices = @transform_0, window_bounds = array<i64: 16, 1024>}, {transform_indices = @transform_1, window_bounds = array<i64: 1, 1024>}, {transform_indices = @transform_2, window_bounds = array<i64: 16, 1024>}]} {
    %c0 = arith.constant 0 : index
    %c0_0 = arith.constant 0 : index
    %0 = vector.load %arg2[%c0, %c0_0] : memref<16x1024xbf16, #tpu.memory_space<vmem>>, vector<16x1024xbf16>
    %c0_1 = arith.constant 0 : index
    %c0_2 = arith.constant 0 : index
    %1 = vector.load %arg3[%c0_1, %c0_2] : memref<1x1024xbf16, #tpu.memory_space<vmem>>, vector<1x1024xbf16>
    %2 = vector.broadcast %1 : vector<1x1024xbf16> to vector<16x1024xbf16>
    %3 = arith.addf %0, %2 : vector<16x1024xbf16>
    %c0_3 = arith.constant 0 : index
    %c0_4 = arith.constant 0 : index
    %4 = vector.load %arg4[%c0_3, %c0_4] : memref<16x1024xbf16, #tpu.memory_space<vmem>>, vector<16x1024xbf16>
    tpu.vector_store %arg4[%c0_3, %c0_4], %3 {strides = array<i32>} : memref<16x1024xbf16, #tpu.memory_space<vmem>>, vector<16x1024xbf16>,
    return
  }
  func.func @transform_0(%arg0: i32, %arg1: i32) -> (i32, i32) {
    %c0_i32 = arith.constant 0 : i32
    return %arg1, %arg0 : i32, i32
  }
  func.func @transform_1(%arg0: i32, %arg1: i32) -> (i32, i32) {
    %c0_i32 = arith.constant 0 : i32
    %c0_i32_0 = arith.constant 0 : i32
    return %c0_i32, %arg0 : i32, i32
  }
  func.func @transform_2(%arg0: i32, %arg1: i32) -> (i32, i32) {
    %c0_i32 = arith.constant 0 : i32
    return %arg1, %arg0 : i32, i32
  }
}

</mosaic_0001>

<llo_original>
// kernel: tpu_custom_call.1
$region0: #{tpu_custom_call.1}
  #allocation0 [shape = 'u32[]', space=smem, size = 0x4, offset = 0x4, fixed_abs, tag = 'smem constant byte address 0x4 - core index']
  #allocation1 [shape = 'u32[144,128]{1,0:T(1,128)}', space=vmem, size = 0x12000, scoped, tag = 'internal scratch']
  %s0 = inlined_call_operand.hbm [shape: bf16[16,2048], index: 0, kind: input, shape index: {}]
  %s1 = inlined_call_operand.hbm [shape: bf16[1,2048], index: 1, kind: input, shape index: {}]
  %s2 = inlined_call_operand.hbm [shape: bf16[16,2048], index: 2, kind: output, shape index: {}]
  %s3 = sld [smem:[#allocation0]]
  $region49: #{tpu_custom_call.1} parent=0
    _
  %s5 = ssub.s32 1, %s3
  %s6 = scalar_select 0, %s5, %s3
  $region1: #{tpu_custom_call.1} parent=0
    #allocation2 [shape = 'u8[65536]{0}', space=vmem, size = 0x10000, scoped, tag = 'input window, operand 0']
    #allocation3 [shape = 's32[2]{0}', space=sflag, size = 0x8, scoped, tag = 'scoped memory for tpu_custom_call.1']
    #allocation4 [shape = 's32[2]{0}', space=sflag, size = 0x8, scoped, tag = 'scoped memory for tpu_custom_call.1']
    #allocation5 [shape = 'u8[8192]{0}', space=vmem, size = 0x2000, scoped, tag = 'input window, operand 1']
    #allocation6 [shape = 's32[2]{0}', space=sflag, size = 0x8, scoped, tag = 'scoped memory for tpu_custom_call.1']
    #allocation7 [shape = 'u8[65536]{0}', space=vmem, size = 0x10000, scoped, tag = 'output window, operand 0']
    %7 = vsyncpa [#allocation3], 0
    %s8 = scalar_lea.sflag [#allocation3], 1
    %9 = vsyncpa %s8, 0
    %10 = vsyncpa [#allocation6], 0
    %s11 = scalar_lea.sflag [#allocation6], 1
    %12 = vsyncpa %s11, 0
    %13 = vsyncpa [#allocation4], 0
    %s14 = scalar_lea.sflag [#allocation4], 1
    %15 = vsyncpa %s14, 0
    loop: start=0, step=1, limit=4
    $region2: #{tpu_custom_call.1} parent=1 // loop_pre_header
      _
    $region3: #{tpu_custom_call.1} parent=1 // loop_header
      %s17 = sphi 0, %s21
      %p18 = scmp.ge.s32.totalorder %s17, 4
      %s24 = sphi 0, %s36
      %s25 = sphi 0, %s32
      %s26 = sphi 0, %s24
      %s27 = sphi 0, %s25
      %s28 = sphi 0, %s26
      %s29 = sphi 0, %s27
      %s41 = sphi 0, %s43
      %s44 = sphi 0, %s41
      %s45 = sphi 0, %s44
      %s61 = sphi 0, %s45
      %s67 = sphi 0, %s69
      %s70 = sphi 0, %s67
      %s71 = sphi 0, %s70
      %s87 = sphi 0, %s71
      %s95 = sphi 0, %s97
      %s98 = sphi 0, %s95
      %s99 = sphi 0, %s98
      %s115 = sphi 0, %s99
    $region4: #{tpu_custom_call.1} parent=1 // loop_header_branch
      %20 = sbr.rel (%p18) target = $region8
    $region5: #{tpu_custom_call.1} parent=1 // loop_body
      %s22 = ssub.s32 %s17, 1
      %s23 = ssub.s32 %s17, 2
      %s30 = sadd.s32 1, %s25
      %p31 = scmp.ge.s32.totalorder %s30, 1
      %s32 = scalar_select %p31, 0, %s30
      %s33 = sadd.s32 1, %s24
      %s34 = scalar_select %p31, %s33, %s24
      %p35 = scmp.ge.s32.totalorder %s34, 2
      %s36 = scalar_select %p35, 0, %s34
      %s37 = ssub.s32 %s25, %s32
      %s38 = ssub.s32 %s24, %s36
      %s39 = sor.u32 %s37, %s38
      %p40 = scmp.eq.s32.totalorder %s39, 0
      %s42 = sadd.s32 %s41, 1
      %s43 = scalar_select %p40, %s41, %s42
      %p46 = pneg %p40
      %p47 = scmp.eq.s32.totalorder %s17, 1
      %p48 = por %p46, %p47
      %p49 = scmp.ne.s32.totalorder %s41, %s44
      %p50 = scmp.eq.s32.totalorder %s17, 0
      %p51 = por %p49, %p50
      %p52 = scmp.ne.s32.totalorder %s41, %s44
      %p53 = scmp.eq.s32.totalorder %s22, 1
      %p54 = por %p52, %p53
      %p55 = scmp.ne.s32.totalorder %s44, %s45
      %p56 = scmp.eq.s32.totalorder %s22, 0
      %p57 = por %p55, %p56
      %p58 = scmp.ne.s32.totalorder %s44, %s45
      %p59 = scmp.eq.s32.totalorder %s23, 1
      %p60 = por %p58, %p59
      %p62 = scmp.ne.s32.totalorder %s45, %s61
      %p63 = scmp.eq.s32.totalorder %s23, 0
      %p64 = por %p62, %p63
      %s65 = ssub.s32 %s24, %s36
      %p66 = scmp.eq.s32.totalorder %s65, 0
      %s68 = sadd.s32 %s67, 1
      %s69 = scalar_select %p66, %s67, %s68
      %p72 = pneg %p66
      %p73 = scmp.eq.s32.totalorder %s17, 1
      %p74 = por %p72, %p73
      %p75 = scmp.ne.s32.totalorder %s67, %s70
      %p76 = scmp.eq.s32.totalorder %s17, 0
      %p77 = por %p75, %p76
      %p78 = scmp.ne.s32.totalorder %s67, %s70
      %p79 = scmp.eq.s32.totalorder %s22, 1
      %p80 = por %p78, %p79
      %p81 = scmp.ne.s32.totalorder %s70, %s71
      %p82 = scmp.eq.s32.totalorder %s22, 0
      %p83 = por %p81, %p82
      %p84 = scmp.ne.s32.totalorder %s70, %s71
      %p85 = scmp.eq.s32.totalorder %s23, 1
      %p86 = por %p84, %p85
      %p88 = scmp.ne.s32.totalorder %s71, %s87
      %p89 = scmp.eq.s32.totalorder %s23, 0
      %p90 = por %p88, %p89
      %s91 = ssub.s32 %s25, %s32
      %s92 = ssub.s32 %s24, %s36
      %s93 = sor.u32 %s91, %s92
      %p94 = scmp.eq.s32.totalorder %s93, 0
      %s96 = sadd.s32 %s95, 1
      %s97 = scalar_select %p94, %s95, %s96
      %p100 = pneg %p94
      %p101 = scmp.eq.s32.totalorder %s17, 1
      %p102 = por %p100, %p101
      %p103 = scmp.ne.s32.totalorder %s95, %s98
      %p104 = scmp.eq.s32.totalorder %s17, 0
      %p105 = por %p103, %p104
      %p106 = scmp.ne.s32.totalorder %s95, %s98
      %p107 = scmp.eq.s32.totalorder %s22, 1
      %p108 = por %p106, %p107
      %p109 = scmp.ne.s32.totalorder %s98, %s99
      %p110 = scmp.eq.s32.totalorder %s22, 0
      %p111 = por %p109, %p110
      %p112 = scmp.ne.s32.totalorder %s98, %s99
      %p113 = scmp.eq.s32.totalorder %s23, 1
      %p114 = por %p112, %p113
      %p116 = scmp.ne.s32.totalorder %s99, %s115
      %p117 = scmp.eq.s32.totalorder %s23, 0
      %p118 = por %p116, %p117
      %p119 = scmp.le.s32.totalorder 1, %s17
      %p120 = scmp.lt.s32.totalorder %s17, 3
      %p121 = pnand %p119, %p120
      %p122 = pneg %p121
      // Predicated region
      $region9: #{tpu_custom_call.1} parent=5 // pred_check
        _
      $region10: #{tpu_custom_call.1} parent=5 // pred_check_branch
        %124 = sbr.rel (%p121) target = $region12
      $region11: #{tpu_custom_call.1} parent=5 // pred_region
        %s125 = ssub.s32 %s17, 1
      $region12: #{tpu_custom_call.1} parent=5 // pred_fallthru
        _
      %p126 = scmp.lt.s32.totalorder %s17, 2
      // Predicated region
      $region13: #{tpu_custom_call.1} parent=5 // pred_check
        %p127 = pneg %p126
      $region14: #{tpu_custom_call.1} parent=5 // pred_check_branch
        %129 = sbr.rel (%p127) target = $region16
      $region15: #{tpu_custom_call.1} parent=5 // pred_region
        // Predicated region
        $region17: #{tpu_custom_call.1} parent=15 // pred_check
          %p130 = pneg %p51
        $region18: #{tpu_custom_call.1} parent=15 // pred_check_branch
          %132 = sbr.rel (%p130) target = $region20
        $region19: #{tpu_custom_call.1} parent=15 // pred_region
          %s133 = sand.u32 %s41, 1
          %s134 = scalar_lea.sflag [#allocation3], %s133
          %s135 = sand.u32 %s41, 1
          %s136 = smul.addr %s135, 64
          %s137 = scalar_lea.vmem [#allocation2], %s136
          %s138 = smul.u32 2, %s25
          %s139 = smul.u32 8, %s24
          %s141 = ssub.s32 1024, 1024
          %142 = vsyncadd %s134, %s141
          %s143 = smul.addr %s138, 16
          %s144 = sadd.s32 %s139, %s143
          %s145 = smul.addr %s144, 64
          %s146 = scalar_lea.hbm %s0, %s145
          %s147 = sshll.u32 %s137, 4
          %s148 = int_to_ptr.vmem [resolvable:$true] %s147
          %153 = dma.hbm_to_vmem [thread:$0]  %s146, 1024, %s148, %s134, 1024, 512, 32
        $region20: #{tpu_custom_call.1} parent=15 // pred_fallthru
          _
        // Predicated region
        $region21: #{tpu_custom_call.1} parent=15 // pred_check
          %p154 = pneg %p77
        $region22: #{tpu_custom_call.1} parent=15 // pred_check_branch
          %156 = sbr.rel (%p154) target = $region24
        $region23: #{tpu_custom_call.1} parent=15 // pred_region
          %s157 = sand.u32 %s67, 1
          %s158 = scalar_lea.sflag [#allocation6], %s157
          %s159 = sand.u32 %s67, 1
          %s160 = smul.addr %s159, 8
          %s161 = scalar_lea.vmem [#allocation5], %s160
          %s162 = smul.u32 8, %s24
          %s164 = ssub.s32 128, 128
          %165 = vsyncadd %s158, %s164
          %s166 = smul.addr %s162, 16
          %s167 = scalar_lea.hbm %s1, %s166
          %s169 = sshll.u32 %s161, 4
          %s170 = int_to_ptr.vmem [resolvable:$true] %s169
          %172 = dma.hbm_to_vmem [thread:$0]  %s167, 128, %s170, %s158
        $region24: #{tpu_custom_call.1} parent=15 // pred_fallthru
          _
      $region16: #{tpu_custom_call.1} parent=5 // pred_fallthru
        _
      %p173 = scmp.le.s32.totalorder 1, %s17
      %p174 = scmp.lt.s32.totalorder %s17, 3
      %p175 = pnand %p173, %p174
      %p176 = pneg %p175
      // Predicated region
      $region25: #{tpu_custom_call.1} parent=5 // pred_check
        _
      $region26: #{tpu_custom_call.1} parent=5 // pred_check_branch
        %178 = sbr.rel (%p175) target = $region28
      $region27: #{tpu_custom_call.1} parent=5 // pred_region
        %s179 = ssub.s32 %s17, 1
        %s180 = sand.u32 %s44, 1
        %s181 = scalar_lea.sflag [#allocation3], %s180
        %s182 = sand.u32 %s44, 1
        %s183 = smul.addr %s182, 64
        %s184 = scalar_lea.vmem [#allocation2], %s183
        // Predicated region
        $region29: #{tpu_custom_call.1} parent=27 // pred_check
          %p185 = pneg %p57
        $region30: #{tpu_custom_call.1} parent=27 // pred_check_branch
          %187 = sbr.rel (%p185) target = $region32
        $region31: #{tpu_custom_call.1} parent=27 // pred_region
          %188 = dma.done %s181, 1024
        $region32: #{tpu_custom_call.1} parent=27 // pred_fallthru
          _
        %s189 = sand.u32 %s70, 1
        %s190 = scalar_lea.sflag [#allocation6], %s189
        %s191 = sand.u32 %s70, 1
        %s192 = smul.addr %s191, 8
        %s193 = scalar_lea.vmem [#allocation5], %s192
        // Predicated region
        $region33: #{tpu_custom_call.1} parent=27 // pred_check
          %p194 = pneg %p83
        $region34: #{tpu_custom_call.1} parent=27 // pred_check_branch
          %196 = sbr.rel (%p194) target = $region36
        $region35: #{tpu_custom_call.1} parent=27 // pred_region
          %197 = dma.done %s190, 128
        $region36: #{tpu_custom_call.1} parent=27 // pred_fallthru
          _
        %s198 = sand.u32 %s44, 1
        %s199 = scalar_lea.sflag [#allocation3], %s198
        %s200 = sand.u32 %s44, 1
        %s201 = smul.addr %s200, 64
        %s202 = scalar_lea.vmem [#allocation2], %s201
        %p203 = pneg %p57
        %p204 = pneg %p54
        %s205 = sand.u32 %s70, 1
        %s206 = scalar_lea.sflag [#allocation6], %s205
        %s207 = sand.u32 %s70, 1
        %s208 = smul.addr %s207, 8
        %s209 = scalar_lea.vmem [#allocation5], %s208
        %p210 = pneg %p83
        %p211 = pneg %p80
        %p212 = pneg %p111
        %p213 = pneg %p108
        %s214 = sand.u32 %s98, 1
        %s215 = scalar_lea.sflag [#allocation4], %s214
        %s216 = sand.u32 %s98, 1
        %s217 = smul.addr %s216, 64
        %s218 = scalar_lea.vmem [#allocation7], %s217
        %s219 = smul.u32 2, %s27
        %s220 = smul.u32 8, %s26
        %s221 = smul.u32 8, %s26
        %s222 = smul.u32 2, %s27
        %s223 = smul.u32 8, %s26
        %v224 = vld [vmem:[%s184] sm:$0xff]
        %v225 = vld [vmem:[%s184 + $0x8] sm:$0xff]
        %v226 = vld [vmem:[%s184 + $0x10] sm:$0xff]
        %v227 = vld [vmem:[%s184 + $0x18] sm:$0xff]
        %v228 = vld [vmem:[%s184 + $0x20] sm:$0xff]
        %v229 = vld [vmem:[%s184 + $0x28] sm:$0xff]
        %v230 = vld [vmem:[%s184 + $0x30] sm:$0xff]
        %v231 = vld [vmem:[%s184 + $0x38] sm:$0xff]
        %v232 = vld [vmem:[%s193] sm:$0xff]
        %v234 = vcombine.high %v232, %v232
        %v236 = vunpack.c.l.s4 1966171168
        %v237 = vunpack.c.0.s8 %v236
        %v238 = vlaneseq
        %v239 = vshrl.u32 %v238, 7
        %v240 = vsub.s32 %v237, %v239
        %v241 = vrot.slane %v232, %v240
        %v243 = vunpack.c.l.s4 1966171168
        %v244 = vunpack.c.0.s8 %v243
        %v245 = vlaneseq
        %v246 = vshrl.u32 %v245, 7
        %v247 = vsub.s32 %v244, %v246
        %v248 = vrot.slane %v234, %v247
        %v249 = vcombine.high %v241, %v241
        %v250 = vcombine.high %v248, %v248
        %v252 = vunpack.c.l.s4 1966171168
        %v253 = vunpack.c.0.s8 %v252
        %v254 = vlaneseq
        %v255 = vshrl.u32 %v254, 7
        %v256 = vsub.s32 %v253, %v255
        %v257 = vrot.slane %v241, %v256
        %v259 = vunpack.c.l.s4 1966171168
        %v260 = vunpack.c.0.s8 %v259
        %v261 = vlaneseq
        %v262 = vshrl.u32 %v261, 7
        %v263 = vsub.s32 %v260, %v262
        %v264 = vrot.slane %v248, %v263
        %v266 = vunpack.c.l.s4 1966171168
        %v267 = vunpack.c.0.s8 %v266
        %v268 = vlaneseq
        %v269 = vshrl.u32 %v268, 7
        %v270 = vsub.s32 %v267, %v269
        %v271 = vrot.slane %v249, %v270
        %v273 = vunpack.c.l.s4 1966171168
        %v274 = vunpack.c.0.s8 %v273
        %v275 = vlaneseq
        %v276 = vshrl.u32 %v275, 7
        %v277 = vsub.s32 %v274, %v276
        %v278 = vrot.slane %v250, %v277
        %v279 = vcombine.high %v257, %v257
        %v280 = vcombine.high %v264, %v264
        %v281 = vcombine.high %v271, %v271
        %v282 = vcombine.high %v278, %v278
        %v284 = vpack.i.b16 %v257, %v257
        %v286 = vlaneseq
        %v287 = vshrl.u32 %v286, 7
        %v288 = vsub.s32 0, %v287
        %v289 = vrot.slane %v284, %v288
        %v291 = vpack.i.b16 %v271, %v271
        %v293 = vlaneseq
        %v294 = vshrl.u32 %v293, 7
        %v295 = vsub.s32 0, %v294
        %v296 = vrot.slane %v291, %v295
        %v298 = vpack.i.b16 %v279, %v279
        %v300 = vlaneseq
        %v301 = vshrl.u32 %v300, 7
        %v302 = vsub.s32 0, %v301
        %v303 = vrot.slane %v298, %v302
        %v305 = vpack.i.b16 %v281, %v281
        %v307 = vlaneseq
        %v308 = vshrl.u32 %v307, 7
        %v309 = vsub.s32 0, %v308
        %v310 = vrot.slane %v305, %v309
        %v312 = vpack.i.b16 %v264, %v264
        %v314 = vlaneseq
        %v315 = vshrl.u32 %v314, 7
        %v316 = vsub.s32 0, %v315
        %v317 = vrot.slane %v312, %v316
        %v319 = vpack.i.b16 %v278, %v278
        %v321 = vlaneseq
        %v322 = vshrl.u32 %v321, 7
        %v323 = vsub.s32 0, %v322
        %v324 = vrot.slane %v319, %v323
        %v326 = vpack.i.b16 %v280, %v280
        %v328 = vlaneseq
        %v329 = vshrl.u32 %v328, 7
        %v330 = vsub.s32 0, %v329
        %v331 = vrot.slane %v326, %v330
        %v333 = vpack.i.b16 %v282, %v282
        %v335 = vlaneseq
        %v336 = vshrl.u32 %v335, 7
        %v337 = vsub.s32 0, %v336
        %v338 = vrot.slane %v333, %v337
        %v347 = vunpack.c.l.b16 %v289
        %v348 = vunpack.c.l.b16 %v296
        %v349 = vunpack.c.l.b16 %v303
        %v350 = vunpack.c.l.b16 %v310
        %v351 = vunpack.c.l.b16 %v317
        %v352 = vunpack.c.l.b16 %v324
        %v353 = vunpack.c.l.b16 %v331
        %v354 = vunpack.c.l.b16 %v338
        %v355 = vpack.c.b16 %v348, %v347
        %v356 = vpack.c.b16 %v350, %v349
        %v357 = vpack.c.b16 %v352, %v351
        %v358 = vpack.c.b16 %v354, %v353
        %v363 = vadd.bf16 %v224, %v355
        %v364 = vadd.bf16 %v225, %v356
        %v365 = vadd.bf16 %v226, %v357
        %v366 = vadd.bf16 %v227, %v358
        %v367 = vadd.bf16 %v228, %v355
        %v368 = vadd.bf16 %v229, %v356
        %v369 = vadd.bf16 %v230, %v357
        %v370 = vadd.bf16 %v231, %v358
        %371 = vst [vmem:[%s218] sm:$0xff] %v363
        %372 = vst [vmem:[%s218 + $0x8] sm:$0xff] %v364
        %373 = vst [vmem:[%s218 + $0x10] sm:$0xff] %v365
        %374 = vst [vmem:[%s218 + $0x18] sm:$0xff] %v366
        %375 = vst [vmem:[%s218 + $0x20] sm:$0xff] %v367
        %376 = vst [vmem:[%s218 + $0x28] sm:$0xff] %v368
        %377 = vst [vmem:[%s218 + $0x30] sm:$0xff] %v369
        %378 = vst [vmem:[%s218 + $0x38] sm:$0xff] %v370
        %s379 = sand.u32 %s98, 1
        %s380 = scalar_lea.sflag [#allocation4], %s379
        %s381 = sand.u32 %s98, 1
        %s382 = smul.addr %s381, 64
        %s383 = scalar_lea.vmem [#allocation7], %s382
        // Predicated region
        $region37: #{tpu_custom_call.1} parent=27 // pred_check
          %p384 = pneg %p108
        $region38: #{tpu_custom_call.1} parent=27 // pred_check_branch
          %386 = sbr.rel (%p384) target = $region40
        $region39: #{tpu_custom_call.1} parent=27 // pred_region
          %s387 = smul.u32 2, %s27
          %s388 = smul.u32 8, %s26
          %s390 = ssub.s32 1024, 1024
          %391 = vsyncadd %s380, %s390
          %s392 = smul.addr %s387, 16
          %s393 = sadd.s32 %s388, %s392
          %s394 = smul.addr %s393, 64
          %s395 = scalar_lea.hbm %s2, %s394
          %s396 = sshll.u32 %s383, 4
          %s397 = int_to_ptr.vmem [resolvable:$true] %s396
          %402 = dma.vmem_to_hbm [thread:$0]  %s397, 1024, %s395, %s380, 512, 1024, 32
        $region40: #{tpu_custom_call.1} parent=27 // pred_fallthru
          _
      $region28: #{tpu_custom_call.1} parent=5 // pred_fallthru
        _
      %p403 = scmp.le.s32.totalorder 2, %s17
      // Predicated region
      $region41: #{tpu_custom_call.1} parent=5 // pred_check
        %p404 = pneg %p403
      $region42: #{tpu_custom_call.1} parent=5 // pred_check_branch
        %406 = sbr.rel (%p404) target = $region44
      $region43: #{tpu_custom_call.1} parent=5 // pred_region
        %s407 = ssub.s32 %s17, 2
        // Predicated region
        $region45: #{tpu_custom_call.1} parent=43 // pred_check
          %p408 = pneg %p114
        $region46: #{tpu_custom_call.1} parent=43 // pred_check_branch
          %410 = sbr.rel (%p408) target = $region48
        $region47: #{tpu_custom_call.1} parent=43 // pred_region
          %s411 = sand.u32 %s99, 1
          %s412 = scalar_lea.sflag [#allocation4], %s411
          %s413 = sand.u32 %s99, 1
          %s414 = smul.addr %s413, 64
          %s415 = scalar_lea.vmem [#allocation7], %s414
          %416 = dma.done %s412, 1024
        $region48: #{tpu_custom_call.1} parent=43 // pred_fallthru
          _
      $region44: #{tpu_custom_call.1} parent=5 // pred_fallthru
        _
    $region6: #{tpu_custom_call.1} parent=1 // loop_footer
      %s21 = sadd.s32 1, %s17
    $region7: #{tpu_custom_call.1} parent=1 // loop_footer_branch
      %16 = sbr.rel target = $region3
    $region8: #{tpu_custom_call.1} parent=1 // loop_exit
      _
    %417 = vsyncpa [#allocation3], 1
    %s418 = scalar_lea.sflag [#allocation3], 1
    %419 = vsyncpa %s418, 1
    %420 = vsyncpa [#allocation6], 1
    %s421 = scalar_lea.sflag [#allocation6], 1
    %422 = vsyncpa %s421, 1
    %423 = vsyncpa [#allocation4], 1
    %s424 = scalar_lea.sflag [#allocation4], 1
    %425 = vsyncpa %s424, 1

</llo_original>
